<compile_context>
chip_gen: v7x
topology: tpu7x:2x2x1
jax: 0.10.0
libtpu: 0.0.40
codegen_flags: <defaults>
</compile_context>

<pallas_src>
import functools

import jax
import jax.numpy as jnp
import numpy as np
from jax.experimental import pallas as pl
from jax.experimental.pallas import tpu as pltpu


def make_identity(geometric_model: str = "affine") -> jnp.ndarray:
    """Deterministic 'identity' parameter, matching TnfStabilizer.__init__."""
    if geometric_model == "affine":
        return jnp.array([1.0, 0.0, 0.0, 0.0, 1.0, 0.0], dtype=jnp.float32)
    grid_size = int(geometric_model.split("_")[1])
    x = np.array([2 * i / (grid_size - 1) - 1 for i in range(grid_size)]).reshape(-1, 1)
    grd = np.array(
        [*np.repeat(x, grid_size), *np.reshape([x] * grid_size, (1, -1))[0]]
    ).reshape(-1)
    return jnp.asarray(grd, dtype=jnp.float32)


def _round_up(x: int, m: int) -> int:
    return ((x + m - 1) // m) * m


def _stabilizer_kernel(theta_ref, ident_ref, out_ref, *, theta_lr):
    # Lane-dense FMA: (TM, LANE) * lr + (1, LANE) identity row (sublane broadcast).
    # Narrow (bf16/f16) inputs are upcast in-vreg after the VMEM load.
    t = theta_ref[...].astype(jnp.float32)
    out_ref[...] = theta_lr * t + ident_ref[...]


# Below this element count a Pallas custom call (launch + per-step overhead +
# reshape plumbing) is strictly slower than the fused XLA elementwise op.
_SMALL_ELEMS = 1 << 18
# Keep at least this many grid steps so v7x's 2 TCs each get >= 4 steps and the
# double-buffer pipeline can overlap DMA-in / compute / DMA-out.
_MIN_GRID_STEPS = 8
# Dtypes the kernel loads narrow and upcasts in-vreg.
_NARROW_OK = (np.dtype(jnp.float32), np.dtype(jnp.bfloat16), np.dtype(jnp.float16))


def _tile_budget():
    """(max rows per tile, vmem_limit_bytes) tuned per TPU generation."""
    try:
        kind = jax.devices()[0].device_kind.lower()
    except Exception:
        kind = ""
    if ("v6" in kind) or ("v7" in kind):
        # 4096 * 384 * 4 B = 6 MiB per tile; in + out double-buffered ~ 24 MiB,
        # inside the 32 MiB scoped default (and v7x's 64 MiB physical VMEM/TC).
        return 4096, 28 << 20
    # v5e (16 MiB scoped default) and older/unknown chips: stay conservative.
    return 1024, None


def tnf_stabilizer(theta: jnp.ndarray,
                   identity: jnp.ndarray,
                   theta_lr: float = 0.1) -> jnp.ndarray:
    """JAX/Pallas equivalent of TnfStabilizer.forward."""
    if theta_lr == 1:
        # Matches the PyTorch shortcut exactly: no reshape, no add, input returned as-is.
        return theta

    D = int(identity.shape[0])
    ident = identity.astype(jnp.float32)
    if theta.dtype not in _NARROW_OK:
        theta = theta.astype(jnp.float32)
    theta2 = theta.reshape(-1, D)                        # view(-1, D)
    N = theta2.shape[0]
    total = N * D
    lr = float(theta_lr)

    # --- tiny inputs: plain XLA (fusable, no kernel-launch overhead) --------
    if total < _SMALL_ELEMS:
        return lr * theta2.astype(jnp.float32) + ident[None, :]

    # --- lane-dense Pallas path ---------------------------------------------
    LANE = int(np.lcm(D, 128))              # 384 for the affine model (D=6)
    pad = (-total) % LANE                   # < 384 elements, only if unaligned
    flat = theta2.reshape(-1)
    if pad:
        flat = jnp.pad(flat, (0, pad))
    M = (total + pad) // LANE               # rows of LANE elements (not tile-padded)
    mat = flat.reshape(M, LANE)

    # Identity repeats exactly LANE // D times across a lane-dense row.
    ident_row = jnp.tile(ident, LANE // D).reshape(1, LANE)

    max_tm, vmem_limit = _tile_budget()
    # Sublane-aligned tile, capped so the grid keeps >= _MIN_GRID_STEPS steps.
    TM = max(32, min(max_tm, _round_up(pl.cdiv(M, _MIN_GRID_STEPS), 32)))
    grid = (pl.cdiv(M, TM),)                # ragged last block handled by Pallas

    kernel = functools.partial(_stabilizer_kernel, theta_lr=lr)
    cp_kwargs = dict(dimension_semantics=("parallel",))
    if vmem_limit is not None:
        cp_kwargs["vmem_limit_bytes"] = vmem_limit

    out = pl.pallas_call(
        kernel,
        out_shape=jax.ShapeDtypeStruct((M, LANE), jnp.float32),
        grid=grid,
        in_specs=[
            pl.BlockSpec((TM, LANE), lambda i: (i, 0)),
            pl.BlockSpec((1, LANE), lambda i: (0, 0)),   # resident identity row
        ],
        out_specs=pl.BlockSpec((TM, LANE), lambda i: (i, 0)),
        compiler_params=pltpu.CompilerParams(**cp_kwargs),
    )(mat, ident_row)

    # Restore the PyTorch (-1, D) view; strip the lane pad only if one was added.
    if pad:
        return out.reshape(-1)[:total].reshape(N, D)
    return out.reshape(N, D)


if __name__ == "__main__":
    key = jax.random.PRNGKey(0)

    geometric_model = "affine"
    theta_lr = 0.1
    identity = make_identity(geometric_model)          # (6,)
    D = identity.shape[0]

    def ref_fn(t):
        # Pure-JAX reference of the exact PyTorch semantics.
        return theta_lr * t.reshape(-1, D).astype(jnp.float32) + identity[None, :]

    k1, k2, k3, k4 = jax.random.split(key, 4)

    # 1) tiny input -> fused jnp fast path (typical per-sample usage, 8 x 6)
    theta_small = jax.random.normal(k1, (2, 4, D), dtype=jnp.float32)
    # 2) lane-aligned batch -> Pallas path with zero padding and no output slice
    theta_big = jax.random.normal(k2, (1024, 44, D), dtype=jnp.float32)
    # 3) awkward size -> exercises the <384-elem lane pad and the ragged last block
    theta_odd = jax.random.normal(k3, (46700, D), dtype=jnp.float32)
    # 4) bf16 input -> narrow VMEM load, in-vreg upcast, f32 output
    theta_bf16 = jax.random.normal(k4, (1024, 44, D), dtype=jnp.float32).astype(jnp.bfloat16)

    for th in (theta_small, theta_big, theta_odd, theta_bf16):
        out = jax.block_until_ready(tnf_stabilizer(th, identity, theta_lr=theta_lr))
        ref = jax.block_until_ready(ref_fn(th))
        np.testing.assert_allclose(np.asarray(out), np.asarray(ref),
                                   rtol=1e-6, atol=1e-6)

    # theta_lr == 1 shortcut must return the input untouched, like PyTorch.
    same = tnf_stabilizer(theta_small, identity, theta_lr=1)
    np.testing.assert_allclose(np.asarray(same), np.asarray(theta_small))

    print("KERNEL_OK")
</pallas_src>

<mosaic_0001>
module attributes {stable_mosaic.version = 11 : i64} {
  func.func @_stabilizer_kernel(%arg0: i32, %arg1: memref<96x384xf32, #tpu.memory_space<vmem>>, %arg2: memref<1x384xf32, #tpu.memory_space<vmem>>, %arg3: memref<96x384xf32, #tpu.memory_space<vmem>>) attributes {dimension_semantics = [#tpu.dimension_semantics<parallel>], iteration_bounds = array<i64: 8>, scalar_prefetch = 0 : i64, scratch_operands = 0 : i64, tpu.core_type = #tpu.core_type<tc>, window_params = [{transform_indices = @transform_0, window_bounds = array<i64: 96, 384>}, {pipeline_mode = #tpu.pipeline_mode<synchronous>, transform_indices = @transform_1, window_bounds = array<i64: 1, 384>}, {transform_indices = @transform_2, window_bounds = array<i64: 96, 384>}]} {
    %c0 = arith.constant 0 : index
    %c0_0 = arith.constant 0 : index
    %0 = vector.load %arg1[%c0, %c0_0] : memref<96x384xf32, #tpu.memory_space<vmem>>, vector<96x384xf32>
    %cst = arith.constant 1.000000e-01 : f32
    %1 = vector.broadcast %cst : f32 to vector<96x384xf32>
    %2 = arith.mulf %1, %0 : vector<96x384xf32>
    %c0_1 = arith.constant 0 : index
    %c0_2 = arith.constant 0 : index
    %3 = vector.load %arg2[%c0_1, %c0_2] : memref<1x384xf32, #tpu.memory_space<vmem>>, vector<1x384xf32>
    %4 = vector.broadcast %3 : vector<1x384xf32> to vector<96x384xf32>
    %5 = arith.addf %2, %4 : vector<96x384xf32>
    %c0_3 = arith.constant 0 : index
    %c0_4 = arith.constant 0 : index
    %6 = vector.load %arg3[%c0_3, %c0_4] : memref<96x384xf32, #tpu.memory_space<vmem>>, vector<96x384xf32>
    tpu.vector_store %arg3[%c0_3, %c0_4], %5 {strides = array<i32>} : memref<96x384xf32, #tpu.memory_space<vmem>>, vector<96x384xf32>,
    return
  }
  func.func @transform_0(%arg0: i32) -> (i32, i32) {
    %c0_i32 = arith.constant 0 : i32
    %c0_i32_0 = arith.constant 0 : i32
    return %arg0, %c0_i32 : i32, i32
  }
  func.func @transform_1(%arg0: i32) -> (i32, i32) {
    %c0_i32 = arith.constant 0 : i32
    %c0_i32_0 = arith.constant 0 : i32
    %c0_i32_1 = arith.constant 0 : i32
    return %c0_i32, %c0_i32_0 : i32, i32
  }
  func.func @transform_2(%arg0: i32) -> (i32, i32) {
    %c0_i32 = arith.constant 0 : i32
    %c0_i32_0 = arith.constant 0 : i32
    return %arg0, %c0_i32 : i32, i32
  }
}

</mosaic_0001>

<llo_original>
// kernel: tpu_custom_call.1
$region0: #{tpu_custom_call.1}
  #allocation0 [shape = 'u32[]', space=smem, size = 0x4, offset = 0x4, fixed_abs, tag = 'smem constant byte address 0x4 - core index']
  #allocation1 [shape = 'u32[144,128]{1,0:T(1,128)}', space=vmem, size = 0x12000, scoped, tag = 'internal scratch']
  %s0 = inlined_call_operand.hbm [shape: f32[704,384], index: 0, kind: input, shape index: {}]
  %s1 = inlined_call_operand.hbm [shape: f32[1,384], index: 1, kind: input, shape index: {}]
  %s2 = inlined_call_operand.hbm [shape: f32[704,384], index: 2, kind: output, shape index: {}]
  %s3 = sld [smem:[#allocation0]]
  $region49: #{tpu_custom_call.1} parent=0
    _
  %s5 = ssub.s32 1, %s3
  %s6 = scalar_select 0, %s5, %s3
  $region1: #{tpu_custom_call.1} parent=0
    #allocation2 [shape = 'u8[294912]{0}', space=vmem, size = 0x48000, scoped, tag = 'input window, operand 0']
    #allocation3 [shape = 's32[2]{0}', space=sflag, size = 0x8, scoped, tag = 'scoped memory for tpu_custom_call.1']
    #allocation4 [shape = 's32[2]{0}', space=sflag, size = 0x8, scoped, tag = 'scoped memory for tpu_custom_call.1']
    #allocation5 [shape = 'u8[1536]{0}', space=vmem, size = 0x800, scoped, tag = 'input window, operand 1, single buffered']
    #allocation6 [shape = 's32[1]{0}', space=sflag, size = 0x4, scoped, tag = 'scoped memory for tpu_custom_call.1']
    #allocation7 [shape = 'u8[294912]{0}', space=vmem, size = 0x48000, scoped, tag = 'output window, operand 0']
    %7 = vsyncpa [#allocation3], 0
    %s8 = scalar_lea.sflag [#allocation3], 1
    %9 = vsyncpa %s8, 0
    %10 = vsyncpa [#allocation6], 0
    %11 = vsyncpa [#allocation4], 0
    %s12 = scalar_lea.sflag [#allocation4], 1
    %13 = vsyncpa %s12, 0
    loop: start=0, step=1, limit=10
    $region2: #{tpu_custom_call.1} parent=1 // loop_pre_header
      _
    $region3: #{tpu_custom_call.1} parent=1 // loop_header
      %s15 = sphi 0, %s19
      %p16 = scmp.ge.s32.totalorder %s15, 10
      %s25 = sphi 0, %s27
      %s28 = sphi 0, %s25
      %s29 = sphi 0, %s28
      %s45 = sphi 0, %s29
      %s49 = sphi 0, %s49
      %s51 = sphi 0, %s49
      %s52 = sphi 0, %s51
      %s66 = sphi 0, %s52
      %s72 = sphi 0, %s74
      %s75 = sphi 0, %s72
      %s76 = sphi 0, %s75
      %s92 = sphi 0, %s76
    $region4: #{tpu_custom_call.1} parent=1 // loop_header_branch
      %18 = sbr.rel (%p16) target = $region8
    $region5: #{tpu_custom_call.1} parent=1 // loop_body
      %s20 = ssub.s32 %s15, 1
      %s21 = ssub.s32 %s15, 2
      %s22 = sadd.s32 %s15, 1
      %s23 = ssub.s32 %s15, %s22
      %p24 = scmp.eq.s32.totalorder %s23, 0
      %s26 = sadd.s32 %s25, 1
      %s27 = scalar_select %p24, %s25, %s26
      %p30 = pneg %p24
      %p31 = scmp.eq.s32.totalorder %s15, 7
      %p32 = por %p30, %p31
      %p33 = scmp.ne.s32.totalorder %s25, %s28
      %p34 = scmp.eq.s32.totalorder %s15, 0
      %p35 = por %p33, %p34
      %p36 = scmp.ne.s32.totalorder %s25, %s28
      %p37 = scmp.eq.s32.totalorder %s20, 7
      %p38 = por %p36, %p37
      %p39 = scmp.ne.s32.totalorder %s28, %s29
      %p40 = scmp.eq.s32.totalorder %s20, 0
      %p41 = por %p39, %p40
      %p42 = scmp.ne.s32.totalorder %s28, %s29
      %p43 = scmp.eq.s32.totalorder %s21, 7
      %p44 = por %p42, %p43
      %p46 = scmp.ne.s32.totalorder %s29, %s45
      %p47 = scmp.eq.s32.totalorder %s21, 0
      %p48 = por %p46, %p47
      %s50 = sadd.s32 %s49, 1
      %p53 = scmp.eq.s32.totalorder %s15, 7
      %p54 = scmp.ne.s32.totalorder %s49, %s51
      %p55 = scmp.eq.s32.totalorder %s15, 0
      %p56 = por %p54, %p55
      %p57 = scmp.ne.s32.totalorder %s49, %s51
      %p58 = scmp.eq.s32.totalorder %s20, 7
      %p59 = por %p57, %p58
      %p60 = scmp.ne.s32.totalorder %s51, %s52
      %p61 = scmp.eq.s32.totalorder %s20, 0
      %p62 = por %p60, %p61
      %p63 = scmp.ne.s32.totalorder %s51, %s52
      %p64 = scmp.eq.s32.totalorder %s21, 7
      %p65 = por %p63, %p64
      %p67 = scmp.ne.s32.totalorder %s52, %s66
      %p68 = scmp.eq.s32.totalorder %s21, 0
      %p69 = por %p67, %p68
      %s70 = ssub.s32 %s15, %s22
      %p71 = scmp.eq.s32.totalorder %s70, 0
      %s73 = sadd.s32 %s72, 1
      %s74 = scalar_select %p71, %s72, %s73
      %p77 = pneg %p71
      %p78 = scmp.eq.s32.totalorder %s15, 7
      %p79 = por %p77, %p78
      %p80 = scmp.ne.s32.totalorder %s72, %s75
      %p81 = scmp.eq.s32.totalorder %s15, 0
      %p82 = por %p80, %p81
      %p83 = scmp.ne.s32.totalorder %s72, %s75
      %p84 = scmp.eq.s32.totalorder %s20, 7
      %p85 = por %p83, %p84
      %p86 = scmp.ne.s32.totalorder %s75, %s76
      %p87 = scmp.eq.s32.totalorder %s20, 0
      %p88 = por %p86, %p87
      %p89 = scmp.ne.s32.totalorder %s75, %s76
      %p90 = scmp.eq.s32.totalorder %s21, 7
      %p91 = por %p89, %p90
      %p93 = scmp.ne.s32.totalorder %s76, %s92
      %p94 = scmp.eq.s32.totalorder %s21, 0
      %p95 = por %p93, %p94
      %p96 = scmp.le.s32.totalorder 1, %s15
      %p97 = scmp.lt.s32.totalorder %s15, 9
      %p98 = pnand %p96, %p97
      %p99 = pneg %p98
      // Predicated region
      $region9: #{tpu_custom_call.1} parent=5 // pred_check
        _
      $region10: #{tpu_custom_call.1} parent=5 // pred_check_branch
        %101 = sbr.rel (%p98) target = $region12
      $region11: #{tpu_custom_call.1} parent=5 // pred_region
        %s102 = ssub.s32 %s15, 1
        // Predicated region
        $region13: #{tpu_custom_call.1} parent=11 // pred_check
          %p103 = pneg %p62
        $region14: #{tpu_custom_call.1} parent=11 // pred_check_branch
          %105 = sbr.rel (%p103) target = $region16
        $region15: #{tpu_custom_call.1} parent=11 // pred_region
          %s107 = ssub.s32 48, 48
          %108 = vsyncadd [#allocation6], %s107
          %s110 = sshll.u32 [#allocation5], 4
          %s111 = int_to_ptr.vmem [resolvable:$true] %s110
          %113 = dma.hbm_to_vmem [thread:$0]  %s1, 48, %s111, [#allocation6]
        $region16: #{tpu_custom_call.1} parent=11 // pred_fallthru
          _
      $region12: #{tpu_custom_call.1} parent=5 // pred_fallthru
        _
      %p114 = scmp.lt.s32.totalorder %s15, 8
      // Predicated region
      $region17: #{tpu_custom_call.1} parent=5 // pred_check
        %p115 = pneg %p114
      $region18: #{tpu_custom_call.1} parent=5 // pred_check_branch
        %117 = sbr.rel (%p115) target = $region20
      $region19: #{tpu_custom_call.1} parent=5 // pred_region
        // Predicated region
        $region21: #{tpu_custom_call.1} parent=19 // pred_check
          %p118 = pneg %p35
        $region22: #{tpu_custom_call.1} parent=19 // pred_check_branch
          %120 = sbr.rel (%p118) target = $region24
        $region23: #{tpu_custom_call.1} parent=19 // pred_region
          %s121 = sand.u32 %s25, 1
          %s122 = scalar_lea.sflag [#allocation3], %s121
          %s123 = sand.u32 %s25, 1
          %s124 = smul.addr %s123, 288
          %s125 = scalar_lea.vmem [#allocation2], %s124
          %s126 = smul.u32 12, %s15
          %s127 = ssub.s32 88, %s126
          %p128 = scmp.lt.s32.totalorder %s127, 12
          %s129 = scalar_select %p128, %s127, 12
          %s130 = smul.u32 128, %s129
          %s131 = smul.u32 %s130, 3
          %s133 = ssub.s32 4608, %s131
          %134 = vsyncadd %s122, %s133
          %p135 = scmp.ne.s32.totalorder 0, %s131
          %s136 = smul.addr %s126, 3
          %s137 = smul.addr %s136, 128
          %s138 = scalar_lea.hbm %s0, %s137
          %s139 = smul.u32 24, %s129
          %s140 = sshll.u32 %s125, 4
          %s141 = int_to_ptr.vmem [resolvable:$true] %s140
          %s142 = sshll.u32 %s139, 4
          %146 = dma.hbm_to_vmem [thread:$0]  (%p135), %s138, %s142, %s141, %s122, 384, 384, 24
        $region24: #{tpu_custom_call.1} parent=19 // pred_fallthru
          _
      $region20: #{tpu_custom_call.1} parent=5 // pred_fallthru
        _
      %p147 = scmp.le.s32.totalorder 1, %s15
      %p148 = scmp.lt.s32.totalorder %s15, 9
      %p149 = pnand %p147, %p148
      %p150 = pneg %p149
      // Predicated region
      $region25: #{tpu_custom_call.1} parent=5 // pred_check
        _
      $region26: #{tpu_custom_call.1} parent=5 // pred_check_branch
        %152 = sbr.rel (%p149) target = $region28
      $region27: #{tpu_custom_call.1} parent=5 // pred_region
        %s153 = ssub.s32 %s15, 1
        %s154 = sand.u32 %s28, 1
        %s155 = scalar_lea.sflag [#allocation3], %s154
        %s156 = sand.u32 %s28, 1
        %s157 = smul.addr %s156, 288
        %s158 = scalar_lea.vmem [#allocation2], %s157
        // Predicated region
        $region29: #{tpu_custom_call.1} parent=27 // pred_check
          %p159 = pneg %p41
        $region30: #{tpu_custom_call.1} parent=27 // pred_check_branch
          %161 = sbr.rel (%p159) target = $region32
        $region31: #{tpu_custom_call.1} parent=27 // pred_region
          %162 = dma.done %s155, 4608
        $region32: #{tpu_custom_call.1} parent=27 // pred_fallthru
          _
        // Predicated region
        $region33: #{tpu_custom_call.1} parent=27 // pred_check
          %p163 = pneg %p62
        $region34: #{tpu_custom_call.1} parent=27 // pred_check_branch
          %165 = sbr.rel (%p163) target = $region36
        $region35: #{tpu_custom_call.1} parent=27 // pred_region
          %166 = dma.done [#allocation6], 48
        $region36: #{tpu_custom_call.1} parent=27 // pred_fallthru
          _
        %s167 = sand.u32 %s28, 1
        %s168 = scalar_lea.sflag [#allocation3], %s167
        %s169 = sand.u32 %s28, 1
        %s170 = smul.addr %s169, 288
        %s171 = scalar_lea.vmem [#allocation2], %s170
        %p172 = pneg %p41
        %p173 = pneg %p38
        %p174 = pneg %p62
        %p175 = pneg %p59
        %p176 = pneg %p88
        %p177 = pneg %p85
        %s178 = sand.u32 %s75, 1
        %s179 = scalar_lea.sflag [#allocation4], %s178
        %s180 = sand.u32 %s75, 1
        %s181 = smul.addr %s180, 288
        %s182 = scalar_lea.vmem [#allocation7], %s181
        %s183 = smul.u32 12, %s20
        %s184 = ssub.s32 88, %s183
        %p185 = scmp.lt.s32.totalorder %s184, 12
        %s186 = scalar_select %p185, %s184, 12
        %s187 = smul.u32 128, %s186
        %s188 = smul.u32 %s187, 3
        %s189 = smul.u32 12, %s20
        %s190 = ssub.s32 88, %s189
        %p191 = scmp.lt.s32.totalorder %s190, 12
        %s192 = scalar_select %p191, %s190, 12
        %s193 = smul.u32 128, %s192
        %s194 = smul.u32 %s193, 3
        %v195 = vld [vmem:[%s158] sm:$0xff]
        %v196 = vld [vmem:[%s158 + $0x8] sm:$0xff]
        %v197 = vld [vmem:[%s158 + $0x10] sm:$0xff]
        %v198 = vld [vmem:[%s158 + $0x18] sm:$0xff]
        %v199 = vld [vmem:[%s158 + $0x20] sm:$0xff]
        %v200 = vld [vmem:[%s158 + $0x28] sm:$0xff]
        %v201 = vld [vmem:[%s158 + $0x30] sm:$0xff]
        %v202 = vld [vmem:[%s158 + $0x38] sm:$0xff]
        %v203 = vld [vmem:[%s158 + $0x40] sm:$0xff]
        %v204 = vld [vmem:[%s158 + $0x48] sm:$0xff]
        %v205 = vld [vmem:[%s158 + $0x50] sm:$0xff]
        %v206 = vld [vmem:[%s158 + $0x58] sm:$0xff]
        %v207 = vld [vmem:[%s158 + $0x60] sm:$0xff]
        %v208 = vld [vmem:[%s158 + $0x68] sm:$0xff]
        %v209 = vld [vmem:[%s158 + $0x70] sm:$0xff]
        %v210 = vld [vmem:[%s158 + $0x78] sm:$0xff]
        %v211 = vld [vmem:[%s158 + $0x80] sm:$0xff]
        %v212 = vld [vmem:[%s158 + $0x88] sm:$0xff]
        %v213 = vld [vmem:[%s158 + $0x90] sm:$0xff]
        %v214 = vld [vmem:[%s158 + $0x98] sm:$0xff]
        %v215 = vld [vmem:[%s158 + $0xa0] sm:$0xff]
        %v216 = vld [vmem:[%s158 + $0xa8] sm:$0xff]
        %v217 = vld [vmem:[%s158 + $0xb0] sm:$0xff]
        %v218 = vld [vmem:[%s158 + $0xb8] sm:$0xff]
        %v219 = vld [vmem:[%s158 + $0xc0] sm:$0xff]
        %v220 = vld [vmem:[%s158 + $0xc8] sm:$0xff]
        %v221 = vld [vmem:[%s158 + $0xd0] sm:$0xff]
        %v222 = vld [vmem:[%s158 + $0xd8] sm:$0xff]
        %v223 = vld [vmem:[%s158 + $0xe0] sm:$0xff]
        %v224 = vld [vmem:[%s158 + $0xe8] sm:$0xff]
        %v225 = vld [vmem:[%s158 + $0xf0] sm:$0xff]
        %v226 = vld [vmem:[%s158 + $0xf8] sm:$0xff]
        %v227 = vld [vmem:[%s158 + $0x100] sm:$0xff]
        %v228 = vld [vmem:[%s158 + $0x108] sm:$0xff]
        %v229 = vld [vmem:[%s158 + $0x110] sm:$0xff]
        %v230 = vld [vmem:[%s158 + $0x118] sm:$0xff]
        %v231 = vmul.f32 %v195, 0.1
        %v232 = vmul.f32 %v196, 0.1
        %v233 = vmul.f32 %v197, 0.1
        %v234 = vmul.f32 %v198, 0.1
        %v235 = vmul.f32 %v199, 0.1
        %v236 = vmul.f32 %v200, 0.1
        %v237 = vmul.f32 %v201, 0.1
        %v238 = vmul.f32 %v202, 0.1
        %v239 = vmul.f32 %v203, 0.1
        %v240 = vmul.f32 %v204, 0.1
        %v241 = vmul.f32 %v205, 0.1
        %v242 = vmul.f32 %v206, 0.1
        %v243 = vmul.f32 %v207, 0.1
        %v244 = vmul.f32 %v208, 0.1
        %v245 = vmul.f32 %v209, 0.1
        %v246 = vmul.f32 %v210, 0.1
        %v247 = vmul.f32 %v211, 0.1
        %v248 = vmul.f32 %v212, 0.1
        %v249 = vmul.f32 %v213, 0.1
        %v250 = vmul.f32 %v214, 0.1
        %v251 = vmul.f32 %v215, 0.1
        %v252 = vmul.f32 %v216, 0.1
        %v253 = vmul.f32 %v217, 0.1
        %v254 = vmul.f32 %v218, 0.1
        %v255 = vmul.f32 %v219, 0.1
        %v256 = vmul.f32 %v220, 0.1
        %v257 = vmul.f32 %v221, 0.1
        %v258 = vmul.f32 %v222, 0.1
        %v259 = vmul.f32 %v223, 0.1
        %v260 = vmul.f32 %v224, 0.1
        %v261 = vmul.f32 %v225, 0.1
        %v262 = vmul.f32 %v226, 0.1
        %v263 = vmul.f32 %v227, 0.1
        %v264 = vmul.f32 %v228, 0.1
        %v265 = vmul.f32 %v229, 0.1
        %v266 = vmul.f32 %v230, 0.1
        %v267 = vld [vmem:[#allocation5] sm:$0x7]
        %v269 = vlaneseq
        %v270 = vshrl.u32 %v269, 7
        %v271 = vsub.s32 0, %v270
        %v272 = vrot.slane %v267, %v271
        %v273 = vlaneseq
        %v274 = vshrl.u32 %v273, 7
        %v275 = vsub.s32 1, %v274
        %v276 = vrot.slane %v267, %v275
        %v277 = vlaneseq
        %v278 = vshrl.u32 %v277, 7
        %v279 = vsub.s32 2, %v278
        %v280 = vrot.slane %v267, %v279
        %v284 = vadd.f32 %v231, %v272
        %v285 = vadd.f32 %v232, %v276
        %v286 = vadd.f32 %v233, %v280
        %v287 = vadd.f32 %v234, %v272
        %v288 = vadd.f32 %v235, %v276
        %v289 = vadd.f32 %v236, %v280
        %v290 = vadd.f32 %v237, %v272
        %v291 = vadd.f32 %v238, %v276
        %v292 = vadd.f32 %v239, %v280
        %v293 = vadd.f32 %v240, %v272
        %v294 = vadd.f32 %v241, %v276
        %v295 = vadd.f32 %v242, %v280
        %v296 = vadd.f32 %v243, %v272
        %v297 = vadd.f32 %v244, %v276
        %v298 = vadd.f32 %v245, %v280
        %v299 = vadd.f32 %v246, %v272
        %v300 = vadd.f32 %v247, %v276
        %v301 = vadd.f32 %v248, %v280
        %v302 = vadd.f32 %v249, %v272
        %v303 = vadd.f32 %v250, %v276
        %v304 = vadd.f32 %v251, %v280
        %v305 = vadd.f32 %v252, %v272
        %v306 = vadd.f32 %v253, %v276
        %v307 = vadd.f32 %v254, %v280
        %v308 = vadd.f32 %v255, %v272
        %v309 = vadd.f32 %v256, %v276
        %v310 = vadd.f32 %v257, %v280
        %v311 = vadd.f32 %v258, %v272
        %v312 = vadd.f32 %v259, %v276
        %v313 = vadd.f32 %v260, %v280
        %v314 = vadd.f32 %v261, %v272
        %v315 = vadd.f32 %v262, %v276
        %v316 = vadd.f32 %v263, %v280
        %v317 = vadd.f32 %v264, %v272
        %v318 = vadd.f32 %v265, %v276
        %v319 = vadd.f32 %v266, %v280
        %320 = vst [vmem:[%s182] sm:$0xff] %v284
        %321 = vst [vmem:[%s182 + $0x8] sm:$0xff] %v285
        %322 = vst [vmem:[%s182 + $0x10] sm:$0xff] %v286
        %323 = vst [vmem:[%s182 + $0x18] sm:$0xff] %v287
        %324 = vst [vmem:[%s182 + $0x20] sm:$0xff] %v288
        %325 = vst [vmem:[%s182 + $0x28] sm:$0xff] %v289
        %326 = vst [vmem:[%s182 + $0x30] sm:$0xff] %v290
        %327 = vst [vmem:[%s182 + $0x38] sm:$0xff] %v291
        %328 = vst [vmem:[%s182 + $0x40] sm:$0xff] %v292
        %329 = vst [vmem:[%s182 + $0x48] sm:$0xff] %v293
        %330 = vst [vmem:[%s182 + $0x50] sm:$0xff] %v294
        %331 = vst [vmem:[%s182 + $0x58] sm:$0xff] %v295
        %332 = vst [vmem:[%s182 + $0x60] sm:$0xff] %v296
        %333 = vst [vmem:[%s182 + $0x68] sm:$0xff] %v297
        %334 = vst [vmem:[%s182 + $0x70] sm:$0xff] %v298
        %335 = vst [vmem:[%s182 + $0x78] sm:$0xff] %v299
        %336 = vst [vmem:[%s182 + $0x80] sm:$0xff] %v300
        %337 = vst [vmem:[%s182 + $0x88] sm:$0xff] %v301
        %338 = vst [vmem:[%s182 + $0x90] sm:$0xff] %v302
        %339 = vst [vmem:[%s182 + $0x98] sm:$0xff] %v303
        %340 = vst [vmem:[%s182 + $0xa0] sm:$0xff] %v304
        %341 = vst [vmem:[%s182 + $0xa8] sm:$0xff] %v305
        %342 = vst [vmem:[%s182 + $0xb0] sm:$0xff] %v306
        %343 = vst [vmem:[%s182 + $0xb8] sm:$0xff] %v307
        %344 = vst [vmem:[%s182 + $0xc0] sm:$0xff] %v308
        %345 = vst [vmem:[%s182 + $0xc8] sm:$0xff] %v309
        %346 = vst [vmem:[%s182 + $0xd0] sm:$0xff] %v310
        %347 = vst [vmem:[%s182 + $0xd8] sm:$0xff] %v311
        %348 = vst [vmem:[%s182 + $0xe0] sm:$0xff] %v312
        %349 = vst [vmem:[%s182 + $0xe8] sm:$0xff] %v313
        %350 = vst [vmem:[%s182 + $0xf0] sm:$0xff] %v314
        %351 = vst [vmem:[%s182 + $0xf8] sm:$0xff] %v315
        %352 = vst [vmem:[%s182 + $0x100] sm:$0xff] %v316
        %353 = vst [vmem:[%s182 + $0x108] sm:$0xff] %v317
        %354 = vst [vmem:[%s182 + $0x110] sm:$0xff] %v318
        %355 = vst [vmem:[%s182 + $0x118] sm:$0xff] %v319
        %s356 = sand.u32 %s75, 1
        %s357 = scalar_lea.sflag [#allocation4], %s356
        %s358 = sand.u32 %s75, 1
        %s359 = smul.addr %s358, 288
        %s360 = scalar_lea.vmem [#allocation7], %s359
        // Predicated region
        $region37: #{tpu_custom_call.1} parent=27 // pred_check
          %p361 = pneg %p85
        $region38: #{tpu_custom_call.1} parent=27 // pred_check_branch
          %363 = sbr.rel (%p361) target = $region40
        $region39: #{tpu_custom_call.1} parent=27 // pred_region
          %s364 = smul.u32 12, %s20
          %s365 = ssub.s32 88, %s364
          %p366 = scmp.lt.s32.totalorder %s365, 12
          %s367 = scalar_select %p366, %s365, 12
          %s368 = smul.u32 128, %s367
          %s369 = smul.u32 %s368, 3
          %s371 = ssub.s32 4608, %s369
          %372 = vsyncadd %s357, %s371
          %p373 = scmp.ne.s32.totalorder 0, %s369
          %s374 = smul.addr %s364, 3
          %s375 = smul.addr %s374, 128
          %s376 = scalar_lea.hbm %s2, %s375
          %s377 = smul.u32 24, %s367
          %s378 = sshll.u32 %s360, 4
          %s379 = int_to_ptr.vmem [resolvable:$true] %s378
          %s380 = sshll.u32 %s377, 4
          %384 = dma.vmem_to_hbm [thread:$0]  (%p373), %s379, %s380, %s376, %s357, 384, 384, 24
        $region40: #{tpu_custom_call.1} parent=27 // pred_fallthru
          _
      $region28: #{tpu_custom_call.1} parent=5 // pred_fallthru
        _
      %p385 = scmp.le.s32.totalorder 2, %s15
      // Predicated region
      $region41: #{tpu_custom_call.1} parent=5 // pred_check
        %p386 = pneg %p385
      $region42: #{tpu_custom_call.1} parent=5 // pred_check_branch
        %388 = sbr.rel (%p386) target = $region44
      $region43: #{tpu_custom_call.1} parent=5 // pred_region
        %s389 = ssub.s32 %s15, 2
        // Predicated region
        $region45: #{tpu_custom_call.1} parent=43 // pred_check
          %p390 = pneg %p91
        $region46: #{tpu_custom_call.1} parent=43 // pred_check_branch
          %392 = sbr.rel (%p390) target = $region48
        $region47: #{tpu_custom_call.1} parent=43 // pred_region
          %s393 = sand.u32 %s76, 1
          %s394 = scalar_lea.sflag [#allocation4], %s393
          %s395 = sand.u32 %s76, 1
          %s396 = smul.addr %s395, 288
          %s397 = scalar_lea.vmem [#allocation7], %s396
          %398 = dma.done %s394, 4608
        $region48: #{tpu_custom_call.1} parent=43 // pred_fallthru
          _
      $region44: #{tpu_custom_call.1} parent=5 // pred_fallthru
        _
    $region6: #{tpu_custom_call.1} parent=1 // loop_footer
      %s19 = sadd.s32 1, %s15
    $region7: #{tpu_custom_call.1} parent=1 // loop_footer_branch
      %14 = sbr.rel target = $region3
    $region8: #{tpu_custom_call.1} parent=1 // loop_exit
      _
    %399 = vsyncpa [#allocation3], 1
    %s400 = scalar_lea.sflag [#allocation3], 1
    %401 = vsyncpa %s400, 1
    %402 = vsyncpa [#allocation6], 1
    %403 = vsyncpa [#allocation4], 1
    %s404 = scalar_lea.sflag [#allocation4], 1
    %405 = vsyncpa %s404, 1

</llo_original>
